<compile_context>
chip_gen: v5e
topology: v5e:2x2
jax: 0.10.0
libtpu: 0.0.40
codegen_flags: <defaults>
</compile_context>

<pallas_src>
import jax
import jax.numpy as jnp
from jax.experimental import pallas as pl
from jax.experimental.pallas import tpu as pltpu

STATE_DIM = 16
ACTION_DIM = 2
HIDDEN = (256, 256)


def _round_up(x, m):
    return (x + m - 1) // m * m


def deep_q_kernel(s_ref, a_ref, w1s_ref, w1a_ref, b1_ref,
                  w2_ref, b2_ref, w3_ref, b3_ref, o_ref):
    # s_ref:   (TB, 16)  f32        a_ref:   (TB, 2)   f32
    # w1s_ref: (16, 256) bf16       w1a_ref: (2, 256)  f32    b1_ref: (1, 256) f32
    # w2_ref:  (256,256) bf16       b2_ref:  (1, 256)  f32
    # w3_ref:  (1, 256)  f32        b3_ref:  (1, 1)    f32
    # o_ref:   (1, 1, TB) f32  (lane-dense row per grid step)
    s_bf = s_ref[...].astype(jnp.bfloat16)   # VPU cast, inputs arrive as f32
    a = a_ref[...]

    # Layer 1: state part on the MXU (K=16, f32 accumulate),
    # action part as two f32 VPU broadcast-FMAs (K=2 matmul is pure MXU waste).
    h1 = jnp.dot(s_bf, w1s_ref[...], preferred_element_type=jnp.float32)
    h1 = h1 + a[:, 0:1] * w1a_ref[0:1, :]
    h1 = h1 + a[:, 1:2] * w1a_ref[1:2, :]
    h1 = jnp.maximum(h1 + b1_ref[...], 0.0)

    # Layer 2: bf16 operands on the MXU, f32 accumulation.
    h2 = jnp.dot(h1.astype(jnp.bfloat16), w2_ref[...],
                 preferred_element_type=jnp.float32) + b2_ref[...]
    h2 = jnp.maximum(h2, 0.0)

    # Layer 3 (out_features=1): VPU broadcast-multiply + lane reduction, then
    # transpose to a lane-dense (1, TB) row (XLU slot; avoids masked stores).
    q = jnp.sum(h2 * w3_ref[...], axis=-1, keepdims=True) + b3_ref[...]   # (TB, 1)
    o_ref[0] = jnp.transpose(q).astype(o_ref.dtype)                       # (1, TB)


def _choose_batch_tile(B, block_b):
    """Multiple-of-8 batch tile. Prefers a divisor of the rounded batch (so no
    padding pass is needed) and splits a single-tile batch in two when it is
    big enough, so the grid length is >= 2 (v7x uses both TensorCores)."""
    B8 = _round_up(max(B, 1), 8)
    cap = min(_round_up(max(block_b, 8), 8), B8)
    n_tiles = pl.cdiv(B8, cap)
    if n_tiles == 1 and B8 >= 512:   # worth sharding across 2 TCs
        n_tiles = 2
    return _round_up(pl.cdiv(B8, n_tiles), 8)


def deep_q_forward(state, action, prepared_params, *, block_b=1024):
    """Pallas forward pass. `prepared_params` comes from prepare_params()."""
    w1s, w1a, b1, w2, b2, w3row, b3 = prepared_params
    B = state.shape[0]
    H0, H1 = HIDDEN

    TB = _choose_batch_tile(B, block_b)
    Bp = _round_up(B, TB)

    s = state.astype(jnp.float32)   # f32 into the kernel; bf16 cast happens on-chip
    a = action.astype(jnp.float32)
    if Bp != B:                     # ragged tail only; divisor tiles avoid this
        s = jnp.pad(s, ((0, Bp - B), (0, 0)))
        a = jnp.pad(a, ((0, Bp - B), (0, 0)))

    grid = (Bp // TB,)
    tiled = lambda shape: pl.BlockSpec(shape, lambda i: (i, 0))
    resident = lambda shape: pl.BlockSpec(shape, lambda i: (0, 0))

    out = pl.pallas_call(
        deep_q_kernel,
        out_shape=jax.ShapeDtypeStruct((grid[0], 1, TB), jnp.float32),
        grid=grid,
        in_specs=[
            tiled((TB, STATE_DIM)),
            tiled((TB, ACTION_DIM)),
            resident((STATE_DIM, H0)),
            resident((ACTION_DIM, H0)),
            resident((1, H0)),
            resident((H0, H1)),
            resident((1, H1)),
            resident((1, H1)),
            resident((1, 1)),
        ],
        out_specs=pl.BlockSpec((1, 1, TB), lambda i: (i, 0, 0)),
        compiler_params=pltpu.CompilerParams(
            dimension_semantics=("parallel",)),
    )(s, a, w1s, w1a, b1, w2, b2, w3row, b3)

    # (G, 1, TB) lane-dense rows -> (B, 1) column, padded rows dropped.
    return out.reshape(Bp)[:B].reshape(B, 1)


def init_params(key):
    """Deterministic init mimicking nn.Linear's U(-1/sqrt(fan_in), 1/sqrt(fan_in)).
    Weights stored transposed as (in, out), f32 canonical."""
    dims = [(STATE_DIM + ACTION_DIM, HIDDEN[0]),
            (HIDDEN[0], HIDDEN[1]),
            (HIDDEN[1], 1)]
    params = []
    for i, (fan_in, fan_out) in enumerate(dims):
        kw, kb = jax.random.split(jax.random.fold_in(key, i))
        bound = 1.0 / (fan_in ** 0.5)
        w = jax.random.uniform(kw, (fan_in, fan_out), jnp.float32, -bound, bound)
        b = jax.random.uniform(kb, (1, fan_out), jnp.float32, -bound, bound)
        params += [w, b]
    return tuple(params)


def prepare_params(params):
    """One-time kernel-ready param prep: split w1 into state/action parts,
    cast MXU operands to bf16, reshape w3 to a (1, 256) row. Do this once,
    not per forward call."""
    w1, b1, w2, b2, w3, b3 = params
    bf = jnp.bfloat16
    return (
        w1[:STATE_DIM].astype(bf),                    # (16, 256) bf16 -> MXU
        w1[STATE_DIM:].astype(jnp.float32),           # (2, 256)  f32  -> VPU FMAs
        b1.reshape(1, HIDDEN[0]).astype(jnp.float32),
        w2.astype(bf),                                # (256, 256) bf16 -> MXU
        b2.reshape(1, HIDDEN[1]).astype(jnp.float32),
        w3.reshape(1, HIDDEN[1]).astype(jnp.float32), # (1, 256) f32 row
        b3.reshape(1, 1).astype(jnp.float32),
    )


def reference_forward(state, action, params):
    """Pure-JAX reference using the same precision recipe as the kernel
    (bf16 operands on the big matmuls, f32 accumulate, f32 action/final layer)."""
    w1, b1, w2, b2, w3, b3 = params
    bf = jnp.bfloat16
    h1 = (jnp.dot(state.astype(bf), w1[:STATE_DIM].astype(bf),
                  preferred_element_type=jnp.float32)
          + action @ w1[STATE_DIM:]
          + b1)
    h1 = jax.nn.relu(h1)
    h2 = jax.nn.relu(
        jnp.dot(h1.astype(bf), w2.astype(bf),
                preferred_element_type=jnp.float32) + b2)
    return h2 @ w3 + b3


if __name__ == "__main__":
    key = jax.random.PRNGKey(0)
    k_s, k_a, k_p = jax.random.split(key, 3)

    B = 8
    state = jax.random.normal(k_s, (B, STATE_DIM), jnp.float32)
    action = jax.random.normal(k_a, (B, ACTION_DIM), jnp.float32)
    params = init_params(k_p)
    prepared = prepare_params(params)

    out = jax.block_until_ready(deep_q_forward(state, action, prepared))
    ref = reference_forward(state, action, params)

    assert out.shape == (B, 1), f"bad shape {out.shape}"
    assert jnp.allclose(out, ref, atol=1e-3, rtol=1e-3), "mismatch vs JAX reference"

    print("KERNEL_OK")
</pallas_src>

<mosaic_0001>
module attributes {stable_mosaic.version = 11 : i64} {
  func.func @deep_q_kernel(%arg0: i32, %arg1: memref<8x16xf32, #tpu.memory_space<vmem>>, %arg2: memref<8x2xf32, #tpu.memory_space<vmem>>, %arg3: memref<16x256xbf16, #tpu.memory_space<vmem>>, %arg4: memref<2x256xf32, #tpu.memory_space<vmem>>, %arg5: memref<1x256xf32, #tpu.memory_space<vmem>>, %arg6: memref<256x256xbf16, #tpu.memory_space<vmem>>, %arg7: memref<1x256xf32, #tpu.memory_space<vmem>>, %arg8: memref<1x256xf32, #tpu.memory_space<vmem>>, %arg9: memref<1x1xf32, #tpu.memory_space<vmem>>, %arg10: memref<1x1x8xf32, #tpu.memory_space<vmem>>) attributes {dimension_semantics = [#tpu.dimension_semantics<parallel>], iteration_bounds = array<i64: 1>, scalar_prefetch = 0 : i64, scratch_operands = 0 : i64, tpu.core_type = #tpu.core_type<tc>, window_params = [{transform_indices = @transform_0, window_bounds = array<i64: 8, 16>}, {transform_indices = @transform_1, window_bounds = array<i64: 8, 2>}, {pipeline_mode = #tpu.pipeline_mode<synchronous>, transform_indices = @transform_2, window_bounds = array<i64: 16, 256>}, {pipeline_mode = #tpu.pipeline_mode<synchronous>, transform_indices = @transform_3, window_bounds = array<i64: 2, 256>}, {pipeline_mode = #tpu.pipeline_mode<synchronous>, transform_indices = @transform_4, window_bounds = array<i64: 1, 256>}, {pipeline_mode = #tpu.pipeline_mode<synchronous>, transform_indices = @transform_5, window_bounds = array<i64: 256, 256>}, {pipeline_mode = #tpu.pipeline_mode<synchronous>, transform_indices = @transform_6, window_bounds = array<i64: 1, 256>}, {pipeline_mode = #tpu.pipeline_mode<synchronous>, transform_indices = @transform_7, window_bounds = array<i64: 1, 256>}, {pipeline_mode = #tpu.pipeline_mode<synchronous>, transform_indices = @transform_8, window_bounds = array<i64: 1, 1>}, {transform_indices = @transform_9, window_bounds = array<i64: 1, 1, 8>}]} {
    %c0 = arith.constant 0 : index
    %c0_0 = arith.constant 0 : index
    %0 = vector.load %arg1[%c0, %c0_0] : memref<8x16xf32, #tpu.memory_space<vmem>>, vector<8x16xf32>
    %1 = arith.truncf %0 : vector<8x16xf32> to vector<8x16xbf16>
    %c0_1 = arith.constant 0 : index
    %c0_2 = arith.constant 0 : index
    %2 = vector.load %arg2[%c0_1, %c0_2] : memref<8x2xf32, #tpu.memory_space<vmem>>, vector<8x2xf32>
    %c0_3 = arith.constant 0 : index
    %c0_4 = arith.constant 0 : index
    %3 = vector.load %arg3[%c0_3, %c0_4] : memref<16x256xbf16, #tpu.memory_space<vmem>>, vector<16x256xbf16>
    %cst = arith.constant dense<0.000000e+00> : vector<8x256xf32>
    %4 = tpu.matmul %1, %3, %cst {dimension_numbers = #tpu.dot_dimension_numbers<[1], [0], [0], [1], [0, 0, 1, 1], [], []>} : vector<8x16xbf16>, vector<16x256xbf16>, vector<8x256xf32> -> vector<8x256xf32>
    %5 = vector.extract_strided_slice %2 {offsets = [0, 0], sizes = [8, 1], strides = [1, 1]} : vector<8x2xf32> to vector<8x1xf32>
    %c0_5 = arith.constant 0 : index
    %c0_6 = arith.constant 0 : index
    %6 = vector.load %arg4[%c0_5, %c0_6] : memref<2x256xf32, #tpu.memory_space<vmem>>, vector<1x256xf32>
    %7 = vector.broadcast %5 : vector<8x1xf32> to vector<8x256xf32>
    %8 = vector.broadcast %6 : vector<1x256xf32> to vector<8x256xf32>
    %9 = arith.mulf %7, %8 : vector<8x256xf32>
    %10 = arith.addf %4, %9 : vector<8x256xf32>
    %11 = vector.extract_strided_slice %2 {offsets = [0, 1], sizes = [8, 1], strides = [1, 1]} : vector<8x2xf32> to vector<8x1xf32>
    %c1 = arith.constant 1 : index
    %c0_7 = arith.constant 0 : index
    %12 = vector.load %arg4[%c1, %c0_7] : memref<2x256xf32, #tpu.memory_space<vmem>>, vector<1x256xf32>
    %13 = vector.broadcast %11 : vector<8x1xf32> to vector<8x256xf32>
    %14 = vector.broadcast %12 : vector<1x256xf32> to vector<8x256xf32>
    %15 = arith.mulf %13, %14 : vector<8x256xf32>
    %16 = arith.addf %10, %15 : vector<8x256xf32>
    %c0_8 = arith.constant 0 : index
    %c0_9 = arith.constant 0 : index
    %17 = vector.load %arg5[%c0_8, %c0_9] : memref<1x256xf32, #tpu.memory_space<vmem>>, vector<1x256xf32>
    %18 = vector.broadcast %17 : vector<1x256xf32> to vector<8x256xf32>
    %19 = arith.addf %16, %18 : vector<8x256xf32>
    %cst_10 = arith.constant 0.000000e+00 : f32
    %20 = vector.broadcast %cst_10 : f32 to vector<8x256xf32>
    %21 = arith.maximumf %19, %20 : vector<8x256xf32>
    %22 = arith.truncf %21 : vector<8x256xf32> to vector<8x256xbf16>
    %c0_11 = arith.constant 0 : index
    %c0_12 = arith.constant 0 : index
    %23 = vector.load %arg6[%c0_11, %c0_12] : memref<256x256xbf16, #tpu.memory_space<vmem>>, vector<256x256xbf16>
    %cst_13 = arith.constant dense<0.000000e+00> : vector<8x256xf32>
    %24 = tpu.matmul %22, %23, %cst_13 {dimension_numbers = #tpu.dot_dimension_numbers<[1], [0], [0], [1], [0, 0, 1, 1], [], []>} : vector<8x256xbf16>, vector<256x256xbf16>, vector<8x256xf32> -> vector<8x256xf32>
    %c0_14 = arith.constant 0 : index
    %c0_15 = arith.constant 0 : index
    %25 = vector.load %arg7[%c0_14, %c0_15] : memref<1x256xf32, #tpu.memory_space<vmem>>, vector<1x256xf32>
    %26 = vector.broadcast %25 : vector<1x256xf32> to vector<8x256xf32>
    %27 = arith.addf %24, %26 : vector<8x256xf32>
    %cst_16 = arith.constant 0.000000e+00 : f32
    %28 = vector.broadcast %cst_16 : f32 to vector<8x256xf32>
    %29 = arith.maximumf %27, %28 : vector<8x256xf32>
    %c0_17 = arith.constant 0 : index
    %c0_18 = arith.constant 0 : index
    %30 = vector.load %arg8[%c0_17, %c0_18] : memref<1x256xf32, #tpu.memory_space<vmem>>, vector<1x256xf32>
    %31 = vector.broadcast %30 : vector<1x256xf32> to vector<8x256xf32>
    %32 = arith.mulf %29, %31 : vector<8x256xf32>
    %cst_19 = arith.constant dense<0.000000e+00> : vector<8xf32>
    %33 = vector.multi_reduction <add>, %32, %cst_19 [1] : vector<8x256xf32> to vector<8xf32>
    %34 = vector.shape_cast %33 : vector<8xf32> to vector<8x1xf32>
    %c0_20 = arith.constant 0 : index
    %c0_21 = arith.constant 0 : index
    %35 = vector.load %arg9[%c0_20, %c0_21] : memref<1x1xf32, #tpu.memory_space<vmem>>, vector<1x1xf32>
    %36 = vector.broadcast %35 : vector<1x1xf32> to vector<8x1xf32>
    %37 = arith.addf %34, %36 : vector<8x1xf32>
    %38 = tpu.transpose %37, [1, 0] : vector<8x1xf32> -> vector<1x8xf32>
    %c0_22 = arith.constant 0 : index
    %c0_23 = arith.constant 0 : index
    %c0_24 = arith.constant 0 : index
    %39 = vector.load %arg10[%c0_22, %c0_23, %c0_24] : memref<1x1x8xf32, #tpu.memory_space<vmem>>, vector<1x1x8xf32>
    %40 = vector.shape_cast %39 : vector<1x1x8xf32> to vector<1x8xf32>
    %41 = vector.shape_cast %38 : vector<1x8xf32> to vector<1x1x8xf32>
    tpu.vector_store %arg10[%c0_22, %c0_23, %c0_24], %41 {strides = array<i32>} : memref<1x1x8xf32, #tpu.memory_space<vmem>>, vector<1x1x8xf32>,
    return
  }
  func.func @transform_0(%arg0: i32) -> (i32, i32) {
    %c0_i32 = arith.constant 0 : i32
    %c0_i32_0 = arith.constant 0 : i32
    return %arg0, %c0_i32 : i32, i32
  }
  func.func @transform_1(%arg0: i32) -> (i32, i32) {
    %c0_i32 = arith.constant 0 : i32
    %c0_i32_0 = arith.constant 0 : i32
    return %arg0, %c0_i32 : i32, i32
  }
  func.func @transform_2(%arg0: i32) -> (i32, i32) {
    %c0_i32 = arith.constant 0 : i32
    %c0_i32_0 = arith.constant 0 : i32
    %c0_i32_1 = arith.constant 0 : i32
    return %c0_i32, %c0_i32_0 : i32, i32
  }
  func.func @transform_3(%arg0: i32) -> (i32, i32) {
    %c0_i32 = arith.constant 0 : i32
    %c0_i32_0 = arith.constant 0 : i32
    %c0_i32_1 = arith.constant 0 : i32
    return %c0_i32, %c0_i32_0 : i32, i32
  }
  func.func @transform_4(%arg0: i32) -> (i32, i32) {
    %c0_i32 = arith.constant 0 : i32
    %c0_i32_0 = arith.constant 0 : i32
    %c0_i32_1 = arith.constant 0 : i32
    return %c0_i32, %c0_i32_0 : i32, i32
  }
  func.func @transform_5(%arg0: i32) -> (i32, i32) {
    %c0_i32 = arith.constant 0 : i32
    %c0_i32_0 = arith.constant 0 : i32
    %c0_i32_1 = arith.constant 0 : i32
    return %c0_i32, %c0_i32_0 : i32, i32
  }
  func.func @transform_6(%arg0: i32) -> (i32, i32) {
    %c0_i32 = arith.constant 0 : i32
    %c0_i32_0 = arith.constant 0 : i32
    %c0_i32_1 = arith.constant 0 : i32
    return %c0_i32, %c0_i32_0 : i32, i32
  }
  func.func @transform_7(%arg0: i32) -> (i32, i32) {
    %c0_i32 = arith.constant 0 : i32
    %c0_i32_0 = arith.constant 0 : i32
    %c0_i32_1 = arith.constant 0 : i32
    return %c0_i32, %c0_i32_0 : i32, i32
  }
  func.func @transform_8(%arg0: i32) -> (i32, i32) {
    %c0_i32 = arith.constant 0 : i32
    %c0_i32_0 = arith.constant 0 : i32
    %c0_i32_1 = arith.constant 0 : i32
    return %c0_i32, %c0_i32_0 : i32, i32
  }
  func.func @transform_9(%arg0: i32) -> (i32, i32, i32) {
    %c0_i32 = arith.constant 0 : i32
    %c0_i32_0 = arith.constant 0 : i32
    %c0_i32_1 = arith.constant 0 : i32
    return %arg0, %c0_i32, %c0_i32_0 : i32, i32, i32
  }
}

</mosaic_0001>

<llo_original>
// kernel: tpu_custom_call.1
$region0: #{tpu_custom_call.1}
  #allocation0 [shape = 'u32[]', space=smem, size = 0x4, offset = 0x4, fixed_abs, tag = 'smem constant byte address 0x4 - core index']
  #allocation1 [shape = 'u32[72,128]{1,0:T(1,128)}', space=vmem, size = 0x9000, scoped, tag = 'internal scratch']
  #allocation2 [shape = 'f32[1,1]{1,0:T(1,128)S(1)}', space=vmem, size = 0x200, scoped, tag = 'scoped memory for tpu_custom_call.1']
  %s0 = inlined_call_operand.vmem [shape: f32[8,16], index: 0, kind: input, shape index: {}]
  %s1 = inlined_call_operand.vmem [shape: f32[8,2], index: 1, kind: input, shape index: {}]
  %s2 = inlined_call_operand.hbm [shape: bf16[16,256], index: 2, kind: input, shape index: {}]
  %s3 = inlined_call_operand.hbm [shape: f32[2,256], index: 3, kind: input, shape index: {}]
  %s4 = inlined_call_operand.vmem [shape: f32[1,256], index: 4, kind: input, shape index: {}]
  %s5 = inlined_call_operand.hbm [shape: bf16[256,256], index: 5, kind: input, shape index: {}]
  %s6 = inlined_call_operand.vmem [shape: f32[1,256], index: 6, kind: input, shape index: {}]
  %s7 = inlined_call_operand.vmem [shape: f32[1,256], index: 7, kind: input, shape index: {}]
  %s8 = inlined_call_operand.<no memory space> [shape: f32[1,1], index: 8, kind: input, shape index: {}]
  %s9 = inlined_call_operand.hbm [shape: f32[1,1,8], index: 9, kind: output, shape index: {}]
  %s10 = sld [smem:[#allocation0]]
  $region58: #{tpu_custom_call.1} parent=0
    _
  %s12 = ssub.s32 1, %s10
  %s13 = scalar_select 0, %s12, %s10
  %v14 = vstv %s8
  %15 = vst [vmem:[#allocation2] sm:$0x1] %v14
  $region1: #{tpu_custom_call.1} parent=0
    #allocation3 [shape = 'u8[8192]{0}', space=vmem, size = 0x2000, scoped, tag = 'input window, operand 2, single buffered']
    #allocation4 [shape = 's32[1]{0}', space=sflag, size = 0x4, scoped, tag = 'scoped memory for tpu_custom_call.1']
    #allocation5 [shape = 's32[1]{0}', space=sflag, size = 0x4, scoped, tag = 'scoped memory for tpu_custom_call.1']
    #allocation6 [shape = 'u8[2048]{0}', space=vmem, size = 0x800, scoped, tag = 'input window, operand 3, single buffered']
    #allocation7 [shape = 's32[1]{0}', space=sflag, size = 0x4, scoped, tag = 'scoped memory for tpu_custom_call.1']
    #allocation8 [shape = 'u8[131072]{0}', space=vmem, size = 0x20000, scoped, tag = 'input window, operand 5, single buffered']
    #allocation9 [shape = 'u8[512]{0}', space=vmem, size = 0x400, scoped, tag = 'output window, operand 0, single buffered']
    %16 = vsyncpa [#allocation4], 0
    %17 = vsyncpa [#allocation7], 0
    %18 = vsyncpa [#allocation5], 0
    // Predicated region
    $region2: #{tpu_custom_call.1} parent=1 // pred_check
      _
    $region3: #{tpu_custom_call.1} parent=1 // pred_check_branch
      %20 = sbr.rel (0) target = $region5
    $region4: #{tpu_custom_call.1} parent=1 // pred_region
      _
    $region5: #{tpu_custom_call.1} parent=1 // pred_fallthru
      _
    // Predicated region
    $region6: #{tpu_custom_call.1} parent=1 // pred_check
      _
    $region7: #{tpu_custom_call.1} parent=1 // pred_check_branch
      %22 = sbr.rel (0) target = $region9
    $region8: #{tpu_custom_call.1} parent=1 // pred_region
      _
    $region9: #{tpu_custom_call.1} parent=1 // pred_fallthru
      _
    // Predicated region
    $region10: #{tpu_custom_call.1} parent=1 // pred_check
      _
    $region11: #{tpu_custom_call.1} parent=1 // pred_check_branch
      %24 = sbr.rel (0) target = $region13
    $region12: #{tpu_custom_call.1} parent=1 // pred_region
      %26 = vsyncadd [#allocation4], 0
      %s27 = sshll.u32 %s2, 4
      %s28 = int_to_ptr.hbm [resolvable:$true] %s27
      %s29 = sshll.u32 [#allocation3], 4
      %s30 = int_to_ptr.vmem [resolvable:$true] %s29
      %35 = dma.hbm_to_vmem [thread:$0]  %s28, 256, %s30, [#allocation4], 128, 128, 8
    $region13: #{tpu_custom_call.1} parent=1 // pred_fallthru
      _
    // Predicated region
    $region14: #{tpu_custom_call.1} parent=1 // pred_check
      _
    $region15: #{tpu_custom_call.1} parent=1 // pred_check_branch
      %37 = sbr.rel (0) target = $region17
    $region16: #{tpu_custom_call.1} parent=1 // pred_region
      %39 = vsyncadd [#allocation7], 0
      %s41 = sshll.u32 %s3, 4
      %s42 = int_to_ptr.hbm [resolvable:$true] %s41
      %s43 = sshll.u32 [#allocation6], 4
      %s44 = int_to_ptr.vmem [resolvable:$true] %s43
      %46 = dma.hbm_to_vmem [thread:$0]  %s42, 64, %s44, [#allocation7]
    $region17: #{tpu_custom_call.1} parent=1 // pred_fallthru
      _
    // Predicated region
    $region18: #{tpu_custom_call.1} parent=1 // pred_check
      _
    $region19: #{tpu_custom_call.1} parent=1 // pred_check_branch
      %48 = sbr.rel (0) target = $region21
    $region20: #{tpu_custom_call.1} parent=1 // pred_region
      _
    $region21: #{tpu_custom_call.1} parent=1 // pred_fallthru
      _
    // Predicated region
    $region22: #{tpu_custom_call.1} parent=1 // pred_check
      _
    $region23: #{tpu_custom_call.1} parent=1 // pred_check_branch
      %50 = sbr.rel (0) target = $region25
    $region24: #{tpu_custom_call.1} parent=1 // pred_region
      %52 = vsyncadd [#allocation7], 0
      %s53 = sshll.u32 %s5, 4
      %s54 = int_to_ptr.hbm [resolvable:$true] %s53
      %s55 = sshll.u32 [#allocation8], 4
      %s56 = int_to_ptr.vmem [resolvable:$true] %s55
      %61 = dma.hbm_to_vmem [thread:$0]  %s54, 4096, %s56, [#allocation7], 128, 128, 8
    $region25: #{tpu_custom_call.1} parent=1 // pred_fallthru
      _
    // Predicated region
    $region26: #{tpu_custom_call.1} parent=1 // pred_check
      _
    $region27: #{tpu_custom_call.1} parent=1 // pred_check_branch
      %63 = sbr.rel (0) target = $region29
    $region28: #{tpu_custom_call.1} parent=1 // pred_region
      _
    $region29: #{tpu_custom_call.1} parent=1 // pred_fallthru
      _
    // Predicated region
    $region30: #{tpu_custom_call.1} parent=1 // pred_check
      _
    $region31: #{tpu_custom_call.1} parent=1 // pred_check_branch
      %65 = sbr.rel (0) target = $region33
    $region32: #{tpu_custom_call.1} parent=1 // pred_region
      _
    $region33: #{tpu_custom_call.1} parent=1 // pred_fallthru
      _
    // Predicated region
    $region34: #{tpu_custom_call.1} parent=1 // pred_check
      _
    $region35: #{tpu_custom_call.1} parent=1 // pred_check_branch
      %67 = sbr.rel (0) target = $region37
    $region36: #{tpu_custom_call.1} parent=1 // pred_region
      _
    $region37: #{tpu_custom_call.1} parent=1 // pred_fallthru
      _
    // Predicated region
    $region38: #{tpu_custom_call.1} parent=1 // pred_check
      _
    $region39: #{tpu_custom_call.1} parent=1 // pred_check_branch
      %69 = sbr.rel (0) target = $region41
    $region40: #{tpu_custom_call.1} parent=1 // pred_region
      %71 = dma.done [#allocation4], 256
    $region41: #{tpu_custom_call.1} parent=1 // pred_fallthru
      _
    // Predicated region
    $region42: #{tpu_custom_call.1} parent=1 // pred_check
      _
    $region43: #{tpu_custom_call.1} parent=1 // pred_check_branch
      %73 = sbr.rel (0) target = $region45
    $region44: #{tpu_custom_call.1} parent=1 // pred_region
      %75 = dma.done [#allocation7], 64
    $region45: #{tpu_custom_call.1} parent=1 // pred_fallthru
      _
    // Predicated region
    $region46: #{tpu_custom_call.1} parent=1 // pred_check
      _
    $region47: #{tpu_custom_call.1} parent=1 // pred_check_branch
      %77 = sbr.rel (0) target = $region49
    $region48: #{tpu_custom_call.1} parent=1 // pred_region
      %79 = dma.done [#allocation7], 4096
    $region49: #{tpu_custom_call.1} parent=1 // pred_fallthru
      _
    %v81 = vld [vmem:[%s0] sm:$0xff]
    %v82 = vpack.c.bf16 %v81, %v81
    %v83 = vld [vmem:[%s1] sm:$0xff]
    %v84 = vld [vmem:[#allocation3] sm:$0xff]
    %v85 = vld [vmem:[#allocation3 + $0x8] sm:$0xff]
    %v86 = vld [vmem:[#allocation6] ss:$2 sm:$0x3]
    %88 = vset.pattern.permute.xlu0 0
    %89 = vperm.xlu0 %88, %v83
    %v90 = vpop.permute.xlu0 %89
    %v93 = vperm.slane %v86, 0
    %v94 = vperm.slane %v86, 1
    %v97 = vmul.f32 %v90, %v93
    %v98 = vmul.f32 %v90, %v94
    %v101 = vunpack.c.l.b16 %v84
    %v102 = vunpack.c.h.b16 %v84
    %v103 = vunpack.c.l.b16 %v85
    %v104 = vunpack.c.h.b16 %v85
    %v105 = vpack.c.b16 %v103, %v101
    %v106 = vpack.c.b16 %v104, %v102
    %vm109 = vcmask 130048
    %v111 = vsel %vm109, %v82, 0
    %113 = vmatpush.bf16.msra.mxu0 0
    %114 = vmatpush.bf16.msra.mxu0 0
    %115 = vmatpush.bf16.msra.mxu0 0
    %116 = vmatpush.bf16.msra.mxu0 0
    %117 = vmatpush.bf16.msra.mxu0 0
    %118 = vmatpush.bf16.msra.mxu0 0
    %119 = vmatpush.bf16.msra.mxu0 0
    %120 = vmatpush.bf16.msra.mxu0 %v105
    %121 = vmatmul.bf16.gmra.mxu0 %v111
    %v122 = vpop.f32.mrf.mxu0
    %v123 = vadd.f32 %v97, %v122
    %v124 = vpop.f32.mrf.mxu0
    %125 = vdwg.mxu0
    %126 = vmatpush.bf16.msra.mxu0 0
    %127 = vmatpush.bf16.msra.mxu0 0
    %128 = vmatpush.bf16.msra.mxu0 0
    %129 = vmatpush.bf16.msra.mxu0 0
    %130 = vmatpush.bf16.msra.mxu0 0
    %131 = vmatpush.bf16.msra.mxu0 0
    %132 = vmatpush.bf16.msra.mxu0 0
    %133 = vmatpush.bf16.msra.mxu0 %v106
    %134 = vmatmul.bf16.gmra.mxu0 %v111
    %v135 = vpop.f32.mrf.mxu0
    %v136 = vadd.f32 %v98, %v135
    %v137 = vpop.f32.mrf.mxu0
    %138 = vdwg.mxu0
    %s139 = scalar_lea.vmem [#allocation6], 1
    %v140 = vld [vmem:[%s139] ss:$2 sm:$0x3]
    %141 = vset.pattern.permute.xlu0 1
    %142 = vperm.xlu0 %141, %v83
    %v143 = vpop.permute.xlu0 %142
    %v146 = vperm.slane %v140, 0
    %v147 = vperm.slane %v140, 1
    %v150 = vmul.f32 %v143, %v146
    %v151 = vmul.f32 %v143, %v147
    %v152 = vadd.f32 %v123, %v150
    %v153 = vadd.f32 %v136, %v151
    %v154 = vld [vmem:[%s4] sm:$0x3]
    %v156 = vperm.slane %v154, 0
    %v157 = vperm.slane %v154, 1
    %v160 = vadd.f32 %v152, %v156
    %v161 = vadd.f32 %v153, %v157
    %v162 = vmax.f32 %v160, 0.0
    %v163 = vmax.f32 %v161, 0.0
    %v164 = vpack.c.bf16 %v162, %v162
    %v165 = vpack.c.bf16 %v163, %v163
    %v166 = vld [vmem:[#allocation8] sm:$0xff]
    %v167 = vld [vmem:[#allocation8 + $0x8] sm:$0xff]
    %v168 = vld [vmem:[#allocation8 + $0x10] sm:$0xff]
    %v169 = vld [vmem:[#allocation8 + $0x18] sm:$0xff]
    %v170 = vld [vmem:[#allocation8 + $0x20] sm:$0xff]
    %v171 = vld [vmem:[#allocation8 + $0x28] sm:$0xff]
    %v172 = vld [vmem:[#allocation8 + $0x30] sm:$0xff]
    %v173 = vld [vmem:[#allocation8 + $0x38] sm:$0xff]
    %v174 = vld [vmem:[#allocation8 + $0x40] sm:$0xff]
    %v175 = vld [vmem:[#allocation8 + $0x48] sm:$0xff]
    %v176 = vld [vmem:[#allocation8 + $0x50] sm:$0xff]
    %v177 = vld [vmem:[#allocation8 + $0x58] sm:$0xff]
    %v178 = vld [vmem:[#allocation8 + $0x60] sm:$0xff]
    %v179 = vld [vmem:[#allocation8 + $0x68] sm:$0xff]
    %v180 = vld [vmem:[#allocation8 + $0x70] sm:$0xff]
    %v181 = vld [vmem:[#allocation8 + $0x78] sm:$0xff]
    %v182 = vld [vmem:[#allocation8 + $0x80] sm:$0xff]
    %v183 = vld [vmem:[#allocation8 + $0x88] sm:$0xff]
    %v184 = vld [vmem:[#allocation8 + $0x90] sm:$0xff]
    %v185 = vld [vmem:[#allocation8 + $0x98] sm:$0xff]
    %v186 = vld [vmem:[#allocation8 + $0xa0] sm:$0xff]
    %v187 = vld [vmem:[#allocation8 + $0xa8] sm:$0xff]
    %v188 = vld [vmem:[#allocation8 + $0xb0] sm:$0xff]
    %v189 = vld [vmem:[#allocation8 + $0xb8] sm:$0xff]
    %v190 = vld [vmem:[#allocation8 + $0xc0] sm:$0xff]
    %v191 = vld [vmem:[#allocation8 + $0xc8] sm:$0xff]
    %v192 = vld [vmem:[#allocation8 + $0xd0] sm:$0xff]
    %v193 = vld [vmem:[#allocation8 + $0xd8] sm:$0xff]
    %v194 = vld [vmem:[#allocation8 + $0xe0] sm:$0xff]
    %v195 = vld [vmem:[#allocation8 + $0xe8] sm:$0xff]
    %v196 = vld [vmem:[#allocation8 + $0xf0] sm:$0xff]
    %v197 = vld [vmem:[#allocation8 + $0xf8] sm:$0xff]
    %v198 = vld [vmem:[%s6] sm:$0x3]
    %v200 = vperm.slane %v198, 0
    %v201 = vperm.slane %v198, 1
    %v236 = vunpack.c.l.b16 %v166
    %v237 = vunpack.c.h.b16 %v166
    %v238 = vunpack.c.l.b16 %v167
    %v239 = vunpack.c.h.b16 %v167
    %v240 = vunpack.c.l.b16 %v168
    %v241 = vunpack.c.h.b16 %v168
    %v242 = vunpack.c.l.b16 %v169
    %v243 = vunpack.c.h.b16 %v169
    %v244 = vunpack.c.l.b16 %v170
    %v245 = vunpack.c.h.b16 %v170
    %v246 = vunpack.c.l.b16 %v171
    %v247 = vunpack.c.h.b16 %v171
    %v248 = vunpack.c.l.b16 %v172
    %v249 = vunpack.c.h.b16 %v172
    %v250 = vunpack.c.l.b16 %v173
    %v251 = vunpack.c.h.b16 %v173
    %v252 = vunpack.c.l.b16 %v174
    %v253 = vunpack.c.h.b16 %v174
    %v254 = vunpack.c.l.b16 %v175
    %v255 = vunpack.c.h.b16 %v175
    %v256 = vunpack.c.l.b16 %v176
    %v257 = vunpack.c.h.b16 %v176
    %v258 = vunpack.c.l.b16 %v177
    %v259 = vunpack.c.h.b16 %v177
    %v260 = vunpack.c.l.b16 %v178
    %v261 = vunpack.c.h.b16 %v178
    %v262 = vunpack.c.l.b16 %v179
    %v263 = vunpack.c.h.b16 %v179
    %v264 = vunpack.c.l.b16 %v180
    %v265 = vunpack.c.h.b16 %v180
    %v266 = vunpack.c.l.b16 %v181
    %v267 = vunpack.c.h.b16 %v181
    %v268 = vunpack.c.l.b16 %v182
    %v269 = vunpack.c.h.b16 %v182
    %v270 = vunpack.c.l.b16 %v183
    %v271 = vunpack.c.h.b16 %v183
    %v272 = vunpack.c.l.b16 %v184
    %v273 = vunpack.c.h.b16 %v184
    %v274 = vunpack.c.l.b16 %v185
    %v275 = vunpack.c.h.b16 %v185
    %v276 = vunpack.c.l.b16 %v186
    %v277 = vunpack.c.h.b16 %v186
    %v278 = vunpack.c.l.b16 %v187
    %v279 = vunpack.c.h.b16 %v187
    %v280 = vunpack.c.l.b16 %v188
    %v281 = vunpack.c.h.b16 %v188
    %v282 = vunpack.c.l.b16 %v189
    %v283 = vunpack.c.h.b16 %v189
    %v284 = vunpack.c.l.b16 %v190
    %v285 = vunpack.c.h.b16 %v190
    %v286 = vunpack.c.l.b16 %v191
    %v287 = vunpack.c.h.b16 %v191
    %v288 = vunpack.c.l.b16 %v192
    %v289 = vunpack.c.h.b16 %v192
    %v290 = vunpack.c.l.b16 %v193
    %v291 = vunpack.c.h.b16 %v193
    %v292 = vunpack.c.l.b16 %v194
    %v293 = vunpack.c.h.b16 %v194
    %v294 = vunpack.c.l.b16 %v195
    %v295 = vunpack.c.h.b16 %v195
    %v296 = vunpack.c.l.b16 %v196
    %v297 = vunpack.c.h.b16 %v196
    %v298 = vunpack.c.l.b16 %v197
    %v299 = vunpack.c.h.b16 %v197
    %v300 = vpack.c.b16 %v238, %v236
    %v301 = vpack.c.b16 %v239, %v237
    %v302 = vpack.c.b16 %v242, %v240
    %v303 = vpack.c.b16 %v243, %v241
    %v304 = vpack.c.b16 %v246, %v244
    %v305 = vpack.c.b16 %v247, %v245
    %v306 = vpack.c.b16 %v250, %v248
    %v307 = vpack.c.b16 %v251, %v249
    %v308 = vpack.c.b16 %v254, %v252
    %v309 = vpack.c.b16 %v255, %v253
    %v310 = vpack.c.b16 %v258, %v256
    %v311 = vpack.c.b16 %v259, %v257
    %v312 = vpack.c.b16 %v262, %v260
    %v313 = vpack.c.b16 %v263, %v261
    %v314 = vpack.c.b16 %v266, %v264
    %v315 = vpack.c.b16 %v267, %v265
    %v316 = vpack.c.b16 %v270, %v268
    %v317 = vpack.c.b16 %v271, %v269
    %v318 = vpack.c.b16 %v274, %v272
    %v319 = vpack.c.b16 %v275, %v273
    %v320 = vpack.c.b16 %v278, %v276
    %v321 = vpack.c.b16 %v279, %v277
    %v322 = vpack.c.b16 %v282, %v280
    %v323 = vpack.c.b16 %v283, %v281
    %v324 = vpack.c.b16 %v286, %v284
    %v325 = vpack.c.b16 %v287, %v285
    %v326 = vpack.c.b16 %v290, %v288
    %v327 = vpack.c.b16 %v291, %v289
    %v328 = vpack.c.b16 %v294, %v292
    %v329 = vpack.c.b16 %v295, %v293
    %v330 = vpack.c.b16 %v298, %v296
    %v331 = vpack.c.b16 %v299, %v297
    %364 = vmatpush.bf16.msra.mxu0 %v314
    %365 = vmatpush.bf16.msra.mxu0 %v312
    %366 = vmatpush.bf16.msra.mxu0 %v310
    %367 = vmatpush.bf16.msra.mxu0 %v308
    %368 = vmatpush.bf16.msra.mxu0 %v306
    %369 = vmatpush.bf16.msra.mxu0 %v304
    %370 = vmatpush.bf16.msra.mxu0 %v302
    %371 = vmatpush.bf16.msra.mxu0 %v300
    %372 = vmatmul.bf16.gmra.mxu0 %v164
    %v373 = vpop.f32.mrf.mxu0
    %v374 = vadd.f32 %v200, %v373
    %v375 = vpop.f32.mrf.mxu0
    %376 = vdwg.mxu0
    %377 = vmatpush.bf16.msra.mxu0 %v330
    %378 = vmatpush.bf16.msra.mxu0 %v328
    %379 = vmatpush.bf16.msra.mxu0 %v326
    %380 = vmatpush.bf16.msra.mxu0 %v324
    %381 = vmatpush.bf16.msra.mxu0 %v322
    %382 = vmatpush.bf16.msra.mxu0 %v320
    %383 = vmatpush.bf16.msra.mxu0 %v318
    %384 = vmatpush.bf16.msra.mxu0 %v316
    %385 = vmatmul.bf16.gmra.mxu0 %v165
    %v386 = vpop.f32.mrf.mxu0
    %v387 = vadd.f32 %v374, %v386
    %v388 = vpop.f32.mrf.mxu0
    %389 = vdwg.mxu0
    %390 = vmatpush.bf16.msra.mxu0 %v315
    %391 = vmatpush.bf16.msra.mxu0 %v313
    %392 = vmatpush.bf16.msra.mxu0 %v311
    %393 = vmatpush.bf16.msra.mxu0 %v309
    %394 = vmatpush.bf16.msra.mxu0 %v307
    %395 = vmatpush.bf16.msra.mxu0 %v305
    %396 = vmatpush.bf16.msra.mxu0 %v303
    %397 = vmatpush.bf16.msra.mxu0 %v301
    %398 = vmatmul.bf16.gmra.mxu0 %v164
    %v399 = vpop.f32.mrf.mxu0
    %v400 = vadd.f32 %v201, %v399
    %v401 = vpop.f32.mrf.mxu0
    %402 = vdwg.mxu0
    %403 = vmatpush.bf16.msra.mxu0 %v331
    %404 = vmatpush.bf16.msra.mxu0 %v329
    %405 = vmatpush.bf16.msra.mxu0 %v327
    %406 = vmatpush.bf16.msra.mxu0 %v325
    %407 = vmatpush.bf16.msra.mxu0 %v323
    %408 = vmatpush.bf16.msra.mxu0 %v321
    %409 = vmatpush.bf16.msra.mxu0 %v319
    %410 = vmatpush.bf16.msra.mxu0 %v317
    %411 = vmatmul.bf16.gmra.mxu0 %v165
    %v412 = vpop.f32.mrf.mxu0
    %v413 = vadd.f32 %v400, %v412
    %v414 = vpop.f32.mrf.mxu0
    %415 = vdwg.mxu0
    %v416 = vmax.f32 %v387, 0.0
    %v417 = vmax.f32 %v413, 0.0
    %v418 = vld [vmem:[%s7] sm:$0x3]
    %v420 = vperm.slane %v418, 0
    %v421 = vperm.slane %v418, 1
    %v424 = vmul.f32 %v416, %v420
    %v425 = vmul.f32 %v417, %v421
    %v426 = vadd.f32 %v424, %v425
    %427 = vadd.xlane.f32.xlu0 %v426
    %v428 = vpop.xlane.xlu0 %427
    %v429 = vld [vmem:[#allocation2] sm:$0x1]
    %v431 = vperm.slane %v429, 0
    %v433 = vadd.f32 %v428, %v431
    %434 = vxpose.xlu0.b32.start [1/16] %v433, 128
    %435 = vxpose.xlu0.b32.cont [2/16] 0.0, 128
    %436 = vxpose.xlu0.b32.cont [3/16] 0.0, 128
    %437 = vxpose.xlu0.b32.cont [4/16] 0.0, 128
    %438 = vxpose.xlu0.b32.cont [5/16] 0.0, 128
    %439 = vxpose.xlu0.b32.cont [6/16] 0.0, 128
    %440 = vxpose.xlu0.b32.cont [7/16] 0.0, 128
    %441 = vxpose.xlu0.b32.cont [8/16] 0.0, 128
    %442 = vxpose.xlu0.b32.cont [9/16] 0.0, 128
    %443 = vxpose.xlu0.b32.cont [10/16] 0.0, 128
    %444 = vxpose.xlu0.b32.cont [11/16] 0.0, 128
    %445 = vxpose.xlu0.b32.cont [12/16] 0.0, 128
    %446 = vxpose.xlu0.b32.cont [13/16] 0.0, 128
    %447 = vxpose.xlu0.b32.cont [14/16] 0.0, 128
    %448 = vxpose.xlu0.b32.cont [15/16] 0.0, 128
    %449 = vxpose.xlu0.b32.end [16/16] 0.0, 128
    %v450 = vpop.trf.xlu0
    %v451 = vpop.trf.xlu0
    %v452 = vpop.trf.xlu0
    %v453 = vpop.trf.xlu0
    %v454 = vpop.trf.xlu0
    %v455 = vpop.trf.xlu0
    %v456 = vpop.trf.xlu0
    %v457 = vpop.trf.xlu0
    %v458 = vpop.trf.xlu0
    %v459 = vpop.trf.xlu0
    %v460 = vpop.trf.xlu0
    %v461 = vpop.trf.xlu0
    %v462 = vpop.trf.xlu0
    %v463 = vpop.trf.xlu0
    %v464 = vpop.trf.xlu0
    %v465 = vpop.trf.xlu0
    %vm466 = vcmask 57344
    %467 = vst.msk [vmem:[#allocation9] sm:$0x1] %vm466, %v450
    // Predicated region
    $region50: #{tpu_custom_call.1} parent=1 // pred_check
      _
    $region51: #{tpu_custom_call.1} parent=1 // pred_check_branch
      %469 = sbr.rel (0) target = $region53
    $region52: #{tpu_custom_call.1} parent=1 // pred_region
      %471 = vsyncadd [#allocation5], 0
      %s473 = sshll.u32 [#allocation9], 4
      %s474 = int_to_ptr.vmem [resolvable:$true] %s473
      %s475 = sshll.u32 %s9, 4
      %s476 = int_to_ptr.hbm [resolvable:$true] %s475
      %478 = dma.vmem_to_hbm [thread:$0]  %s474, 16, %s476, [#allocation5]
    $region53: #{tpu_custom_call.1} parent=1 // pred_fallthru
      _
    // Predicated region
    $region54: #{tpu_custom_call.1} parent=1 // pred_check
      _
    $region55: #{tpu_custom_call.1} parent=1 // pred_check_branch
      %480 = sbr.rel (0) target = $region57
    $region56: #{tpu_custom_call.1} parent=1 // pred_region
      %482 = dma.done [#allocation5], 16
    $region57: #{tpu_custom_call.1} parent=1 // pred_fallthru
      _
    %483 = vsyncpa [#allocation4], 1
    %484 = vsyncpa [#allocation7], 1
    %485 = vsyncpa [#allocation5], 1

</llo_original>
